<compile_context>
chip_gen: v5e
topology: v5e:2x2
jax: 0.10.0
libtpu: 0.0.40
codegen_flags: <defaults>
</compile_context>

<pallas_src>
import jax
import jax.numpy as jnp
from jax.experimental import pallas as pl
from jax.experimental.pallas import tpu as pltpu


def _se_gate_kernel(scale_ref, x_ref, o_ref):
    # scale_ref: (TR, 1), x_ref: (TR, HW) -> o_ref: (TR, HW)
    # Sigmoid in f32 (EUP) for accuracy; broadcast multiply in the input dtype
    # so bf16 inputs stay packed (v6e/v7x VPU has bf16; v5e widens internally).
    gate = jax.nn.sigmoid(scale_ref[...].astype(jnp.float32)).astype(x_ref.dtype)
    o_ref[...] = (gate * x_ref[...]).astype(o_ref.dtype)


def _pick_row_block(rows, hw, dtype_bytes, vmem_budget_bytes=2 << 20):
    """Pick a row tile that divides `rows`, is a multiple of 16 (clean sublane
    tile even for packed bf16), fits a per-block VMEM byte budget (lane-padded
    width), and prefers >=4 grid steps so both v7x TensorCores see >=2
    iterations each (DMA/compute overlap); falls back gracefully for tiny or
    awkward row counts."""
    padded_hw = -(-hw // 128) * 128
    max_rows = max(8, vmem_budget_bytes // (padded_hw * dtype_bytes))
    cands = [rb for rb in range(16, min(rows, max_rows) + 1, 16) if rows % rb == 0]
    if not cands:
        # rows too small (or not a multiple of 16): single full block.  The
        # byte budget above only matters for large N*C, which always has a
        # multiple-of-16 divisor, so this branch is tiny-array territory.
        return rows
    four_plus = [rb for rb in cands if rows // rb >= 4]
    return max(four_plus) if four_plus else max(cands)


def sigmoid_mul(x519, x515):
    """Computes sigmoid(x519) * x515 with (N, C, 1, 1) x (N, C, H, W) broadcast."""
    n, c, h, w = x515.shape
    assert x519.shape == (n, c, 1, 1)
    hw = h * w
    rows = n * c
    dtype_bytes = jnp.dtype(x515.dtype).itemsize

    row_block = _pick_row_block(rows, hw, dtype_bytes)

    scale2d = x519.reshape(rows, 1)       # free reshape (view)
    x2d = x515.reshape(rows, hw)          # free reshape (view)

    cost = pl.CostEstimate(
        flops=rows * hw,                   # broadcast multiply
        transcendentals=rows,              # one sigmoid per (n, c)
        bytes_accessed=2 * rows * hw * dtype_bytes
        + rows * jnp.dtype(x519.dtype).itemsize,
    )

    out2d = pl.pallas_call(
        _se_gate_kernel,
        out_shape=jax.ShapeDtypeStruct((rows, hw), x515.dtype),
        grid_spec=pl.GridSpec(
            grid=(rows // row_block,),
            in_specs=[
                pl.BlockSpec((row_block, 1), lambda i: (i, 0)),
                pl.BlockSpec((row_block, hw), lambda i: (i, 0)),
            ],
            out_specs=pl.BlockSpec((row_block, hw), lambda i: (i, 0)),
        ),
        compiler_params=pltpu.CompilerParams(
            dimension_semantics=("parallel",),
        ),
        cost_estimate=cost,
    )(scale2d, x2d)

    return out2d.reshape(n, c, h, w)


if __name__ == "__main__":
    key = jax.random.PRNGKey(0)
    k1, k2, k3, k4 = jax.random.split(key, 4)

    # Small shapes consistent with the module (N, C, H, W) x (N, C, 1, 1).
    # rows = 2*64 = 128 -> row_block = 32, 4 parallel grid steps.
    x515_s = jax.random.normal(k1, (2, 64, 14, 14), dtype=jnp.float32)
    x519_s = jax.random.normal(k2, (2, 64, 1, 1), dtype=jnp.float32)

    out_s = jax.block_until_ready(sigmoid_mul(x519_s, x515_s))
    ref_s = jax.nn.sigmoid(x519_s) * x515_s
    assert out_s.shape == (2, 64, 14, 14)
    assert jnp.allclose(out_s, ref_s, atol=1e-6, rtol=1e-6)

    # Module-sized check: x515 (1,1344,14,14), x519 (1,1344,1,1)
    # rows = 1344 -> row_block = 336, 4 parallel grid steps.
    x515_f = jax.random.normal(k3, (1, 1344, 14, 14), dtype=jnp.float32)
    x519_f = jax.random.normal(k4, (1, 1344, 1, 1), dtype=jnp.float32)

    out_f = jax.block_until_ready(sigmoid_mul(x519_f, x515_f))
    ref_f = jax.nn.sigmoid(x519_f) * x515_f
    assert out_f.shape == (1, 1344, 14, 14)
    assert jnp.allclose(out_f, ref_f, atol=1e-6, rtol=1e-6)

    print("KERNEL_OK")
</pallas_src>

<mosaic_0001>
module attributes {stable_mosaic.version = 11 : i64} {
  func.func @_se_gate_kernel(%arg0: i32, %arg1: memref<32x1xf32, #tpu.memory_space<vmem>>, %arg2: memref<32x196xf32, #tpu.memory_space<vmem>>, %arg3: memref<32x196xf32, #tpu.memory_space<vmem>>) attributes {dimension_semantics = [#tpu.dimension_semantics<parallel>], iteration_bounds = array<i64: 4>, scalar_prefetch = 0 : i64, scratch_operands = 0 : i64, tpu.core_type = #tpu.core_type<tc>, window_params = [{transform_indices = @transform_0, window_bounds = array<i64: 32, 1>}, {transform_indices = @transform_1, window_bounds = array<i64: 32, 196>}, {transform_indices = @transform_2, window_bounds = array<i64: 32, 196>}]} {
    %c0 = arith.constant 0 : index
    %c0_0 = arith.constant 0 : index
    %0 = vector.load %arg1[%c0, %c0_0] : memref<32x1xf32, #tpu.memory_space<vmem>>, vector<32x1xf32>
    %1 = arith.negf %0 : vector<32x1xf32>
    %2 = math.exp %1 : vector<32x1xf32>
    %cst = arith.constant 1.000000e+00 : f32
    %3 = vector.broadcast %cst : f32 to vector<32x1xf32>
    %4 = arith.addf %3, %2 : vector<32x1xf32>
    %5 = arith.divf %3, %4 : vector<32x1xf32>
    %c0_1 = arith.constant 0 : index
    %c0_2 = arith.constant 0 : index
    %6 = vector.load %arg2[%c0_1, %c0_2] : memref<32x196xf32, #tpu.memory_space<vmem>>, vector<32x196xf32>
    %7 = vector.broadcast %5 : vector<32x1xf32> to vector<32x196xf32>
    %8 = arith.mulf %7, %6 : vector<32x196xf32>
    %c0_3 = arith.constant 0 : index
    %c0_4 = arith.constant 0 : index
    %9 = vector.load %arg3[%c0_3, %c0_4] : memref<32x196xf32, #tpu.memory_space<vmem>>, vector<32x196xf32>
    tpu.vector_store %arg3[%c0_3, %c0_4], %8 {strides = array<i32>} : memref<32x196xf32, #tpu.memory_space<vmem>>, vector<32x196xf32>,
    return
  }
  func.func @transform_0(%arg0: i32) -> (i32, i32) {
    %c0_i32 = arith.constant 0 : i32
    %c0_i32_0 = arith.constant 0 : i32
    return %arg0, %c0_i32 : i32, i32
  }
  func.func @transform_1(%arg0: i32) -> (i32, i32) {
    %c0_i32 = arith.constant 0 : i32
    %c0_i32_0 = arith.constant 0 : i32
    return %arg0, %c0_i32 : i32, i32
  }
  func.func @transform_2(%arg0: i32) -> (i32, i32) {
    %c0_i32 = arith.constant 0 : i32
    %c0_i32_0 = arith.constant 0 : i32
    return %arg0, %c0_i32 : i32, i32
  }
}

</mosaic_0001>

<llo_original>
// kernel: tpu_custom_call.1
$region0: #{tpu_custom_call.1}
  #allocation0 [shape = 'u32[]', space=smem, size = 0x4, offset = 0x4, fixed_abs, tag = 'smem constant byte address 0x4 - core index']
  #allocation1 [shape = 'u32[72,128]{1,0:T(1,128)}', space=vmem, size = 0x9000, scoped, tag = 'internal scratch']
  %s0 = inlined_call_operand.vmem [shape: f32[128,1], index: 0, kind: input, shape index: {}]
  %s1 = inlined_call_operand.vmem [shape: f32[128,196], index: 1, kind: input, shape index: {}]
  %s2 = inlined_call_operand.vmem [shape: f32[128,196], index: 2, kind: output, shape index: {}]
  %s3 = sld [smem:[#allocation0]]
  $region41: #{tpu_custom_call.1} parent=0
    _
  %s5 = ssub.s32 1, %s3
  %s6 = scalar_select 0, %s5, %s3
  loop: start=0, step=1, limit=6
  $region2: #{tpu_custom_call.1} parent=0 // loop_pre_header
    _
  $region3: #{tpu_custom_call.1} parent=0 // loop_header
    %s8 = sphi 0, %s12
    %p9 = scmp.ge.s32.totalorder %s8, 6
    %s18 = sphi 0, %s20
    %s21 = sphi 0, %s18
    %s22 = sphi 0, %s21
    %s38 = sphi 0, %s22
    %s44 = sphi 0, %s46
    %s47 = sphi 0, %s44
    %s48 = sphi 0, %s47
    %s64 = sphi 0, %s48
    %s70 = sphi 0, %s72
    %s73 = sphi 0, %s70
    %s74 = sphi 0, %s73
    %s90 = sphi 0, %s74
  $region4: #{tpu_custom_call.1} parent=0 // loop_header_branch
    %11 = sbr.rel (%p9) target = $region8
  $region5: #{tpu_custom_call.1} parent=0 // loop_body
    %s13 = ssub.s32 %s8, 1
    %s14 = ssub.s32 %s8, 2
    %s15 = sadd.s32 %s8, 1
    %s16 = ssub.s32 %s8, %s15
    %p17 = scmp.eq.s32.totalorder %s16, 0
    %s19 = sadd.s32 %s18, 1
    %s20 = scalar_select %p17, %s18, %s19
    %p23 = pneg %p17
    %p24 = scmp.eq.s32.totalorder %s8, 3
    %p25 = por %p23, %p24
    %p26 = scmp.ne.s32.totalorder %s18, %s21
    %p27 = scmp.eq.s32.totalorder %s8, 0
    %p28 = por %p26, %p27
    %p29 = scmp.ne.s32.totalorder %s18, %s21
    %p30 = scmp.eq.s32.totalorder %s13, 3
    %p31 = por %p29, %p30
    %p32 = scmp.ne.s32.totalorder %s21, %s22
    %p33 = scmp.eq.s32.totalorder %s13, 0
    %p34 = por %p32, %p33
    %p35 = scmp.ne.s32.totalorder %s21, %s22
    %p36 = scmp.eq.s32.totalorder %s14, 3
    %p37 = por %p35, %p36
    %p39 = scmp.ne.s32.totalorder %s22, %s38
    %p40 = scmp.eq.s32.totalorder %s14, 0
    %p41 = por %p39, %p40
    %s42 = ssub.s32 %s8, %s15
    %p43 = scmp.eq.s32.totalorder %s42, 0
    %s45 = sadd.s32 %s44, 1
    %s46 = scalar_select %p43, %s44, %s45
    %p49 = pneg %p43
    %p50 = scmp.eq.s32.totalorder %s8, 3
    %p51 = por %p49, %p50
    %p52 = scmp.ne.s32.totalorder %s44, %s47
    %p53 = scmp.eq.s32.totalorder %s8, 0
    %p54 = por %p52, %p53
    %p55 = scmp.ne.s32.totalorder %s44, %s47
    %p56 = scmp.eq.s32.totalorder %s13, 3
    %p57 = por %p55, %p56
    %p58 = scmp.ne.s32.totalorder %s47, %s48
    %p59 = scmp.eq.s32.totalorder %s13, 0
    %p60 = por %p58, %p59
    %p61 = scmp.ne.s32.totalorder %s47, %s48
    %p62 = scmp.eq.s32.totalorder %s14, 3
    %p63 = por %p61, %p62
    %p65 = scmp.ne.s32.totalorder %s48, %s64
    %p66 = scmp.eq.s32.totalorder %s14, 0
    %p67 = por %p65, %p66
    %s68 = ssub.s32 %s8, %s15
    %p69 = scmp.eq.s32.totalorder %s68, 0
    %s71 = sadd.s32 %s70, 1
    %s72 = scalar_select %p69, %s70, %s71
    %p75 = pneg %p69
    %p76 = scmp.eq.s32.totalorder %s8, 3
    %p77 = por %p75, %p76
    %p78 = scmp.ne.s32.totalorder %s70, %s73
    %p79 = scmp.eq.s32.totalorder %s8, 0
    %p80 = por %p78, %p79
    %p81 = scmp.ne.s32.totalorder %s70, %s73
    %p82 = scmp.eq.s32.totalorder %s13, 3
    %p83 = por %p81, %p82
    %p84 = scmp.ne.s32.totalorder %s73, %s74
    %p85 = scmp.eq.s32.totalorder %s13, 0
    %p86 = por %p84, %p85
    %p87 = scmp.ne.s32.totalorder %s73, %s74
    %p88 = scmp.eq.s32.totalorder %s14, 3
    %p89 = por %p87, %p88
    %p91 = scmp.ne.s32.totalorder %s74, %s90
    %p92 = scmp.eq.s32.totalorder %s14, 0
    %p93 = por %p91, %p92
    %p94 = scmp.le.s32.totalorder 1, %s8
    %p95 = scmp.lt.s32.totalorder %s8, 5
    %p96 = pnand %p94, %p95
    %p97 = pneg %p96
    // Predicated region
    $region9: #{tpu_custom_call.1} parent=5 // pred_check
      _
    $region10: #{tpu_custom_call.1} parent=5 // pred_check_branch
      %99 = sbr.rel (%p96) target = $region12
    $region11: #{tpu_custom_call.1} parent=5 // pred_region
      %s100 = ssub.s32 %s8, 1
    $region12: #{tpu_custom_call.1} parent=5 // pred_fallthru
      _
    %p101 = scmp.lt.s32.totalorder %s8, 4
    // Predicated region
    $region13: #{tpu_custom_call.1} parent=5 // pred_check
      %p102 = pneg %p101
    $region14: #{tpu_custom_call.1} parent=5 // pred_check_branch
      %104 = sbr.rel (%p102) target = $region16
    $region15: #{tpu_custom_call.1} parent=5 // pred_region
      // Predicated region
      $region17: #{tpu_custom_call.1} parent=15 // pred_check
        %p105 = pneg %p28
      $region18: #{tpu_custom_call.1} parent=15 // pred_check_branch
        %107 = sbr.rel (%p105) target = $region20
      $region19: #{tpu_custom_call.1} parent=15 // pred_region
        %s108 = smul.u32 4, %s8
        %p109 = scmp.lt.s32.totalorder %s108, 15
        %s110 = scalar_select %p109, %s108, 15
        %s111 = smul.addr %s110, 8
        %s112 = scalar_lea.vmem %s0, %s111
        %s113 = smul.u32 4, %s8
      $region20: #{tpu_custom_call.1} parent=15 // pred_fallthru
        _
      // Predicated region
      $region21: #{tpu_custom_call.1} parent=15 // pred_check
        %p114 = pneg %p54
      $region22: #{tpu_custom_call.1} parent=15 // pred_check_branch
        %116 = sbr.rel (%p114) target = $region24
      $region23: #{tpu_custom_call.1} parent=15 // pred_region
        %s117 = smul.u32 4, %s8
        %p118 = scmp.lt.s32.totalorder %s117, 15
        %s119 = scalar_select %p118, %s117, 15
        %s120 = smul.addr %s119, 2
        %s121 = smul.addr %s120, 8
        %s122 = scalar_lea.vmem %s1, %s121
        %s123 = smul.u32 4, %s8
      $region24: #{tpu_custom_call.1} parent=15 // pred_fallthru
        _
    $region16: #{tpu_custom_call.1} parent=5 // pred_fallthru
      _
    %p124 = scmp.le.s32.totalorder 1, %s8
    %p125 = scmp.lt.s32.totalorder %s8, 5
    %p126 = pnand %p124, %p125
    %p127 = pneg %p126
    // Predicated region
    $region25: #{tpu_custom_call.1} parent=5 // pred_check
      _
    $region26: #{tpu_custom_call.1} parent=5 // pred_check_branch
      %129 = sbr.rel (%p126) target = $region28
    $region27: #{tpu_custom_call.1} parent=5 // pred_region
      %s130 = ssub.s32 %s8, 1
      %s131 = smul.u32 4, %s13
      %p132 = scmp.lt.s32.totalorder %s131, 15
      %s133 = scalar_select %p132, %s131, 15
      %s134 = smul.addr %s133, 8
      %s135 = scalar_lea.vmem %s0, %s134
      %p136 = pneg %p34
      %p137 = pneg %p31
      %s138 = smul.u32 4, %s13
      %p139 = scmp.lt.s32.totalorder %s138, 15
      %s140 = scalar_select %p139, %s138, 15
      %s141 = smul.addr %s140, 2
      %s142 = smul.addr %s141, 8
      %s143 = scalar_lea.vmem %s1, %s142
      %p144 = pneg %p60
      %p145 = pneg %p57
      %p146 = pneg %p86
      %p147 = pneg %p83
      %s148 = smul.u32 4, %s13
      %p149 = scmp.lt.s32.totalorder %s148, 15
      %s150 = scalar_select %p149, %s148, 15
      %s151 = smul.addr %s150, 2
      %s152 = smul.addr %s151, 8
      %s153 = scalar_lea.vmem %s2, %s152
      %s154 = smul.u32 4, %s13
      %p155 = scmp.lt.s32.totalorder %s154, 15
      %s156 = scalar_select %p155, %s154, 15
      %s157 = smul.addr %s156, 8
      %s158 = scalar_lea.vmem %s0, %s157
      %s159 = smul.u32 4, %s13
      %s160 = smul.u32 4, %s13
      %p161 = scmp.lt.s32.totalorder %s160, 15
      %s162 = scalar_select %p161, %s160, 15
      %s163 = smul.addr %s162, 2
      %s164 = smul.addr %s163, 8
      %s165 = scalar_lea.vmem %s1, %s164
      %s166 = smul.u32 4, %s13
      %s167 = smul.u32 4, %s13
      %p168 = scmp.lt.s32.totalorder %s167, 15
      %s169 = scalar_select %p168, %s167, 15
      %s170 = smul.addr %s169, 2
      %s171 = smul.addr %s170, 8
      %s172 = scalar_lea.vmem %s2, %s171
      %s173 = smul.u32 4, %s13
      %v174 = vld [vmem:[%s158] sm:$0xff]
      %v175 = vld [vmem:[%s158 + $0x8] sm:$0xff]
      %v176 = vld [vmem:[%s158 + $0x10] sm:$0xff]
      %v177 = vld [vmem:[%s158 + $0x18] sm:$0xff]
      %v178 = vxor.u32 %v174, 2147483648
      %v179 = vxor.u32 %v175, 2147483648
      %v180 = vxor.u32 %v176, 2147483648
      %v181 = vxor.u32 %v177, 2147483648
      %v182 = vmul.f32 %v178, 1.442695
      %v183 = vpow.pop %v182
      %v184 = vmul.f32 %v179, 1.442695
      %v185 = vpow.pop %v184
      %v186 = vmul.f32 %v180, 1.442695
      %v187 = vpow.pop %v186
      %v188 = vmul.f32 %v181, 1.442695
      %v189 = vpow.pop %v188
      %v190 = vadd.f32 %v183, 1.0
      %v191 = vadd.f32 %v185, 1.0
      %v192 = vadd.f32 %v187, 1.0
      %v193 = vadd.f32 %v189, 1.0
      %v194 = vrcp.pop %v190
      %v195 = vmul.f32 %v190, %v194
      %v196 = vsub.f32 1.0, %v195
      %v197 = vmul.f32 %v194, %v196
      %v198 = vadd.f32 %v194, %v197
      %vm199 = vweird.f32 %v190
      %vm200 = vweird.f32 %v194
      %vm201 = vmor %vm199, %vm200
      %v202 = vsel %vm201, %v194, %v198
      %v203 = vand.u32 2147483647, %v190
      %vm204 = vcmp.eq.f32.partialorder %v203, 8.507059e+37
      %v205 = vand.u32 %v190, 2147483648
      %v206 = vor.u32 1.1754944e-38, %v205
      %v207 = vsel %vm204, %v206, %v202
      %v208 = vmul.f32 1.0, %v207
      %v209 = vrcp.pop %v191
      %v210 = vmul.f32 %v191, %v209
      %v211 = vsub.f32 1.0, %v210
      %v212 = vmul.f32 %v209, %v211
      %v213 = vadd.f32 %v209, %v212
      %vm214 = vweird.f32 %v191
      %vm215 = vweird.f32 %v209
      %vm216 = vmor %vm214, %vm215
      %v217 = vsel %vm216, %v209, %v213
      %v218 = vand.u32 2147483647, %v191
      %vm219 = vcmp.eq.f32.partialorder %v218, 8.507059e+37
      %v220 = vand.u32 %v191, 2147483648
      %v221 = vor.u32 1.1754944e-38, %v220
      %v222 = vsel %vm219, %v221, %v217
      %v223 = vmul.f32 1.0, %v222
      %v224 = vrcp.pop %v192
      %v225 = vmul.f32 %v192, %v224
      %v226 = vsub.f32 1.0, %v225
      %v227 = vmul.f32 %v224, %v226
      %v228 = vadd.f32 %v224, %v227
      %vm229 = vweird.f32 %v192
      %vm230 = vweird.f32 %v224
      %vm231 = vmor %vm229, %vm230
      %v232 = vsel %vm231, %v224, %v228
      %v233 = vand.u32 2147483647, %v192
      %vm234 = vcmp.eq.f32.partialorder %v233, 8.507059e+37
      %v235 = vand.u32 %v192, 2147483648
      %v236 = vor.u32 1.1754944e-38, %v235
      %v237 = vsel %vm234, %v236, %v232
      %v238 = vmul.f32 1.0, %v237
      %v239 = vrcp.pop %v193
      %v240 = vmul.f32 %v193, %v239
      %v241 = vsub.f32 1.0, %v240
      %v242 = vmul.f32 %v239, %v241
      %v243 = vadd.f32 %v239, %v242
      %vm244 = vweird.f32 %v193
      %vm245 = vweird.f32 %v239
      %vm246 = vmor %vm244, %vm245
      %v247 = vsel %vm246, %v239, %v243
      %v248 = vand.u32 2147483647, %v193
      %vm249 = vcmp.eq.f32.partialorder %v248, 8.507059e+37
      %v250 = vand.u32 %v193, 2147483648
      %v251 = vor.u32 1.1754944e-38, %v250
      %v252 = vsel %vm249, %v251, %v247
      %v253 = vmul.f32 1.0, %v252
      %v254 = vld [vmem:[%s165] sm:$0xff]
      %v255 = vld [vmem:[%s165 + $0x8] sm:$0xff]
      %v256 = vld [vmem:[%s165 + $0x10] sm:$0xff]
      %v257 = vld [vmem:[%s165 + $0x18] sm:$0xff]
      %v258 = vld [vmem:[%s165 + $0x20] sm:$0xff]
      %v259 = vld [vmem:[%s165 + $0x28] sm:$0xff]
      %v260 = vld [vmem:[%s165 + $0x30] sm:$0xff]
      %v261 = vld [vmem:[%s165 + $0x38] sm:$0xff]
      %263 = vset.pattern.permute.xlu0 0
      %264 = vperm.xlu0 %263, %v208
      %v265 = vpop.permute.xlu0 %264
      %268 = vset.pattern.permute.xlu0 0
      %269 = vperm.xlu0 %268, %v223
      %v270 = vpop.permute.xlu0 %269
      %273 = vset.pattern.permute.xlu0 0
      %274 = vperm.xlu0 %273, %v238
      %v275 = vpop.permute.xlu0 %274
      %278 = vset.pattern.permute.xlu0 0
      %279 = vperm.xlu0 %278, %v253
      %v280 = vpop.permute.xlu0 %279
      %v282 = vmul.f32 %v265, %v254
      %v283 = vmul.f32 %v265, %v255
      %v284 = vmul.f32 %v270, %v256
      %v285 = vmul.f32 %v270, %v257
      %v286 = vmul.f32 %v275, %v258
      %v287 = vmul.f32 %v275, %v259
      %v288 = vmul.f32 %v280, %v260
      %v289 = vmul.f32 %v280, %v261
      %290 = vst [vmem:[%s172] sm:$0xff] %v282
      %vm291 = vcmask 556032
      %292 = vst.msk [vmem:[%s172 + $0x8] sm:$0xff] %vm291, %v283
      %293 = vst [vmem:[%s172 + $0x10] sm:$0xff] %v284
      %294 = vst.msk [vmem:[%s172 + $0x18] sm:$0xff] %vm291, %v285
      %295 = vst [vmem:[%s172 + $0x20] sm:$0xff] %v286
      %296 = vst.msk [vmem:[%s172 + $0x28] sm:$0xff] %vm291, %v287
      %297 = vst [vmem:[%s172 + $0x30] sm:$0xff] %v288
      %298 = vst.msk [vmem:[%s172 + $0x38] sm:$0xff] %vm291, %v289
      %s299 = smul.u32 4, %s13
      %p300 = scmp.lt.s32.totalorder %s299, 15
      %s301 = scalar_select %p300, %s299, 15
      %s302 = smul.addr %s301, 2
      %s303 = smul.addr %s302, 8
      %s304 = scalar_lea.vmem %s2, %s303
      // Predicated region
      $region29: #{tpu_custom_call.1} parent=27 // pred_check
        %p305 = pneg %p83
      $region30: #{tpu_custom_call.1} parent=27 // pred_check_branch
        %307 = sbr.rel (%p305) target = $region32
      $region31: #{tpu_custom_call.1} parent=27 // pred_region
        %s308 = smul.u32 4, %s13
      $region32: #{tpu_custom_call.1} parent=27 // pred_fallthru
        _
    $region28: #{tpu_custom_call.1} parent=5 // pred_fallthru
      _
    %p309 = scmp.le.s32.totalorder 2, %s8
    // Predicated region
    $region33: #{tpu_custom_call.1} parent=5 // pred_check
      %p310 = pneg %p309
    $region34: #{tpu_custom_call.1} parent=5 // pred_check_branch
      %312 = sbr.rel (%p310) target = $region36
    $region35: #{tpu_custom_call.1} parent=5 // pred_region
      %s313 = ssub.s32 %s8, 2
      // Predicated region
      $region37: #{tpu_custom_call.1} parent=35 // pred_check
        %p314 = pneg %p89
      $region38: #{tpu_custom_call.1} parent=35 // pred_check_branch
        %316 = sbr.rel (%p314) target = $region40
      $region39: #{tpu_custom_call.1} parent=35 // pred_region
        %s317 = smul.u32 4, %s14
        %p318 = scmp.lt.s32.totalorder %s317, 15
        %s319 = scalar_select %p318, %s317, 15
        %s320 = smul.addr %s319, 2
        %s321 = smul.addr %s320, 8
        %s322 = scalar_lea.vmem %s2, %s321
      $region40: #{tpu_custom_call.1} parent=35 // pred_fallthru
        _
    $region36: #{tpu_custom_call.1} parent=5 // pred_fallthru
      _
  $region6: #{tpu_custom_call.1} parent=0 // loop_footer
    %s12 = sadd.s32 1, %s8
  $region7: #{tpu_custom_call.1} parent=0 // loop_footer_branch
    %7 = sbr.rel target = $region3
  $region8: #{tpu_custom_call.1} parent=0 // loop_exit
    _

</llo_original>
